<compile_context>
chip_gen: v7x
topology: tpu7x:2x2x1
jax: 0.10.0
libtpu: 0.0.40
codegen_flags: <defaults>
</compile_context>

<pallas_src>
import functools

import jax
import jax.numpy as jnp
from jax.experimental import pallas as pl
from jax.experimental.pallas import tpu as pltpu


def _sc_loss_kernel(rewards_ref, lp_ref, lm_ref, num_out_ref, den_out_ref,
                    num_acc, den_acc, *, steps_per_chunk, time_tile, seq_len,
                    full_steps, total_steps, fold_unroll):
    """grid = (n_chunks [parallel], steps_per_chunk [arbitrary/reduction]).

    Hot loop: per 128-lane column chunk, load lp/lm (native dtype), upcast,
    fused multiply-add into (B, 128) vreg carries; one (B, 128) VMEM
    accumulator update per grid step.  Boundary steps (tile overhanging T, or
    whole steps past T introduced by the cdiv chunk split) are lane-masked.
    Epilogue (last step of each chunk): single XLU reduce + rewards dot,
    writes per-chunk (numerator, denominator) partials.
    """
    c = pl.program_id(0)
    t = pl.program_id(1)
    gstep = c * steps_per_chunk + t            # logical (unclamped) global step

    @pl.when(t == 0)
    def _():
        num_acc[...] = jnp.zeros_like(num_acc)
        den_acc[...] = jnp.zeros_like(den_acc)

    batch = num_acc.shape[0]
    n_cols = time_tile // 128

    def accumulate(masked):
        t_start = gstep * time_tile
        lane = jax.lax.broadcasted_iota(jnp.int32, (1, 128), 1)

        def body(j, carry):
            num_p, den_p = carry
            if isinstance(j, int):
                col0 = j * 128
            else:
                col0 = pl.multiple_of(j * 128, 128)
            lp = lp_ref[:, pl.ds(col0, 128)].astype(jnp.float32)
            lm = lm_ref[:, pl.ds(col0, 128)].astype(jnp.float32)
            if masked:
                # Zero out lanes past the end of the sequence.  This also zeroes
                # whole overhang steps (gstep >= n_steps) whose block index was
                # clamped in the index_map, so garbage bytes never contribute.
                valid = (t_start + col0 + lane) < seq_len
                lp = jnp.where(valid, lp, 0.0)
                lm = jnp.where(valid, lm, 0.0)
            return num_p + lp * lm, den_p + lm

        init = (jnp.zeros((batch, 128), jnp.float32),
                jnp.zeros((batch, 128), jnp.float32))
        if n_cols <= 8:
            # short fold: fully unrolled statically
            num_p, den_p = init
            for j in range(n_cols):
                num_p, den_p = body(j, (num_p, den_p))
        else:
            num_p, den_p = jax.lax.fori_loop(0, n_cols, body, init,
                                             unroll=fold_unroll)
        num_acc[...] += num_p
        den_acc[...] += den_p

    # Python-static structure: boundary (masked) work only where it can occur.
    if full_steps >= total_steps:
        accumulate(masked=False)                 # every step fully in bounds
    elif full_steps == 0:
        accumulate(masked=True)                  # every step overhangs T
    else:
        @pl.when(gstep < full_steps)             # steady state: pure VPU loop
        def _():
            accumulate(masked=False)

        @pl.when(gstep >= full_steps)            # tail / overhang steps only
        def _():
            accumulate(masked=True)

    @pl.when(t == steps_per_chunk - 1)
    def _():
        r = rewards_ref[...].astype(jnp.float32)               # (B, 1)
        row = jnp.sum(num_acc[...], axis=1, keepdims=True)     # (B, 1)
        num_out_ref[...] = jnp.sum(row * r, keepdims=True).reshape(1, 1, 1)
        den_out_ref[...] = jnp.sum(den_acc[...], keepdims=True).reshape(1, 1, 1)


def _vmem_capacity_bytes():
    """Physical VMEM capacity; conservative (v7x-sized) fallback if unavailable."""
    try:
        return int(pltpu.get_tpu_info().vmem_capacity_bytes)
    except Exception:
        return 64 * 1024 * 1024


def _choose_time_tile(batch, seq_len, lp_itemsize, lm_itemsize,
                      vmem_budget_bytes, max_tile=32768):
    """Largest 128-aligned tile (<= max_tile, clamped to padded T) under budget.

    budget ~= double-buffered streamed inputs (the (B,128) f32 accumulators and
    resident rewards are negligible): B * tile * 2 * (lp_bytes + lm_bytes).
    """
    t_aligned = ((seq_len + 127) // 128) * 128
    per_col = max(1, batch * 2 * (lp_itemsize + lm_itemsize))
    max_cols = vmem_budget_bytes // per_col
    tile = (max_cols // 128) * 128
    tile = min(tile, t_aligned, max_tile)
    return max(tile, 128)


def g_trn_loss(log_probs, log_masks, rewards, *, time_tile=None):
    """Pallas equivalent of Model.forward(mode='g_trn', ...).

    Args:
      log_probs: (B, T) float32 / bfloat16 (read in native dtype)
      log_masks: (B, T) float32 / bfloat16 (read in native dtype)
      rewards:   (B,)   float
    Returns:
      (loss, reward_mean) — scalar float32 (the op2monitor values).
    """
    B, T = log_probs.shape
    rewards_2d = rewards.reshape(B, 1)

    vmem_cap = _vmem_capacity_bytes()
    if time_tile is None:
        budget = max(8 << 20, int(vmem_cap * 0.4))
        time_tile = _choose_time_tile(B, T, log_probs.dtype.itemsize,
                                      log_masks.dtype.itemsize, budget)
    assert time_tile % 128 == 0, "time_tile must be a multiple of 128 (lane width)"

    n_steps = -(-T // time_tile)                       # cdiv, plain Python int
    # Always split into 2 chunks when possible so v7x's second TensorCore gets
    # half the sweep even for odd step counts (cdiv split + masked overhang).
    n_chunks = 2 if n_steps >= 2 else 1
    steps_per_chunk = -(-n_steps // n_chunks)
    total_steps = n_chunks * steps_per_chunk           # may exceed n_steps by 1
    full_steps = T // time_tile                        # steps fully inside T
    has_overhang = total_steps != n_steps
    last_block = n_steps - 1

    if has_overhang:
        # Clamp overhang steps to the last valid block (DMA stays in bounds);
        # the in-kernel lane mask zeroes their contribution.
        def stream_map(c, t):
            return (0, jnp.minimum(c * steps_per_chunk + t, last_block))
    else:
        def stream_map(c, t):
            return (0, c * steps_per_chunk + t)

    n_cols = time_tile // 128
    if B <= 16:
        desired_unroll = 8
    elif B <= 64:
        desired_unroll = 4
    else:
        desired_unroll = 2
    fold_unroll = max(1, min(desired_unroll, n_cols))

    kernel = functools.partial(
        _sc_loss_kernel,
        steps_per_chunk=steps_per_chunk,
        time_tile=time_tile,
        seq_len=T,
        full_steps=full_steps,
        total_steps=total_steps,
        fold_unroll=fold_unroll,
    )

    # Generation-aware scoped-VMEM limit (well under physical capacity).
    vmem_limit = int(min(max(32 << 20, int(vmem_cap * 0.75)), 100 << 20))

    num_p, den_p = pl.pallas_call(
        kernel,
        out_shape=(
            jax.ShapeDtypeStruct((n_chunks, 1, 1), jnp.float32),
            jax.ShapeDtypeStruct((n_chunks, 1, 1), jnp.float32),
        ),
        grid_spec=pltpu.PrefetchScalarGridSpec(
            num_scalar_prefetch=0,
            grid=(n_chunks, steps_per_chunk),
            in_specs=[
                # rewards stay resident in VMEM for the whole sweep
                pl.BlockSpec((B, 1), lambda c, t: (0, 0)),
                # time tiles, native dtype, streamed with double buffering
                pl.BlockSpec((B, time_tile), stream_map),
                pl.BlockSpec((B, time_tile), stream_map),
            ],
            out_specs=[
                pl.BlockSpec((1, 1, 1), lambda c, t: (c, 0, 0)),
                pl.BlockSpec((1, 1, 1), lambda c, t: (c, 0, 0)),
            ],
            scratch_shapes=[
                pltpu.VMEM((B, 128), jnp.float32),   # folded sum of lp*lm
                pltpu.VMEM((B, 128), jnp.float32),   # folded sum of lm
            ],
        ),
        compiler_params=pltpu.CompilerParams(
            # chunk axis independent (megacore), time axis is the reduction
            dimension_semantics=("parallel", "arbitrary"),
            vmem_limit_bytes=vmem_limit,
        ),
    )(rewards_2d, log_probs, log_masks)

    # Combine per-chunk partials; negate once here instead of per element.
    # NOTE: division by zero if sum(log_masks) == 0 — matches the PyTorch reference.
    loss = -jnp.sum(num_p) / jnp.sum(den_p)
    # rewards.mean() is a trivial B-element reduce; no kernel needed.
    reward_mean = jnp.mean(rewards.astype(jnp.float32))
    return loss, reward_mean


if __name__ == "__main__":
    key = jax.random.PRNGKey(0)
    k1, k2, k3 = jax.random.split(key, 3)

    B, T = 8, 1000  # ragged T (not a multiple of 128) exercises the tail mask

    # log-probs are negative, masks are {0,1}, rewards are centered advantages
    log_probs = -jnp.abs(jax.random.normal(k1, (B, T), dtype=jnp.float32))
    lens = jax.random.randint(k2, (B,), minval=T // 4, maxval=T)
    log_masks = (jnp.arange(T)[None, :] < lens[:, None]).astype(jnp.float32)
    rewards = jax.random.normal(k3, (B,), dtype=jnp.float32)

    def ref(lp, lm, r):
        lp = lp.astype(jnp.float32)
        lm = lm.astype(jnp.float32)
        r = r.astype(jnp.float32)
        return (jnp.sum((-r[:, None] * lp) * lm) / jnp.sum(lm), jnp.mean(r))

    ref_loss, ref_rmean = ref(log_probs, log_masks, rewards)

    # 1) auto tile (whole T in one step, ragged tail masked), f32 inputs
    loss, reward_mean = g_trn_loss(log_probs, log_masks, rewards)
    jax.block_until_ready((loss, reward_mean))
    assert jnp.allclose(loss, ref_loss, rtol=1e-5, atol=1e-5), (loss, ref_loss)
    assert jnp.allclose(reward_mean, ref_rmean, rtol=1e-5, atol=1e-5)

    # 2) forced small tile -> multi-step reduction, even two-chunk split
    loss2, _ = g_trn_loss(log_probs, log_masks, rewards, time_tile=128)
    jax.block_until_ready(loss2)
    assert jnp.allclose(loss2, ref_loss, rtol=1e-5, atol=1e-5), (loss2, ref_loss)

    # 3) odd step count -> cdiv chunk split with a clamped, fully-masked overhang step
    loss3, _ = g_trn_loss(log_probs, log_masks, rewards, time_tile=384)
    jax.block_until_ready(loss3)
    assert jnp.allclose(loss3, ref_loss, rtol=1e-5, atol=1e-5), (loss3, ref_loss)

    # 4) bf16 inputs read natively (half the HBM traffic), f32 accumulation
    lp_bf16 = log_probs.astype(jnp.bfloat16)
    lm_bf16 = log_masks.astype(jnp.bfloat16)
    loss4, _ = g_trn_loss(lp_bf16, lm_bf16, rewards)
    jax.block_until_ready(loss4)
    ref_loss4, _ = ref(lp_bf16, lm_bf16, rewards)
    assert jnp.allclose(loss4, ref_loss4, rtol=1e-4, atol=1e-4), (loss4, ref_loss4)

    print("KERNEL_OK")
</pallas_src>

<mosaic_0001>
module attributes {stable_mosaic.version = 11 : i64} {
  func.func @_sc_loss_kernel(%arg0: i32, %arg1: i32, %arg2: memref<8x1xf32, #tpu.memory_space<vmem>>, %arg3: memref<8x1024xf32, #tpu.memory_space<vmem>>, %arg4: memref<8x1024xf32, #tpu.memory_space<vmem>>, %arg5: memref<1x1x1xf32, #tpu.memory_space<vmem>>, %arg6: memref<1x1x1xf32, #tpu.memory_space<vmem>>, %arg7: memref<8x128xf32, #tpu.memory_space<vmem>>, %arg8: memref<8x128xf32, #tpu.memory_space<vmem>>) attributes {dimension_semantics = [#tpu.dimension_semantics<parallel>, #tpu.dimension_semantics<arbitrary>], iteration_bounds = array<i64: 1, 1>, scalar_prefetch = 0 : i64, scratch_operands = 2 : i64, tpu.core_type = #tpu.core_type<tc>, window_params = [{pipeline_mode = #tpu.pipeline_mode<synchronous>, transform_indices = @transform_0, window_bounds = array<i64: 8, 1>}, {transform_indices = @transform_1, window_bounds = array<i64: 8, 1024>}, {transform_indices = @transform_2, window_bounds = array<i64: 8, 1024>}, {transform_indices = @transform_3, window_bounds = array<i64: 1, 1, 1>}, {transform_indices = @transform_4, window_bounds = array<i64: 1, 1, 1>}]} {
    %c1_i32 = arith.constant 1 : i32
    %0 = arith.muli %arg0, %c1_i32 : i32
    %1 = arith.addi %0, %arg1 : i32
    %c0_i32 = arith.constant 0 : i32
    %2 = arith.cmpi eq, %arg1, %c0_i32 : i32
    %3 = arith.extui %2 : i1 to i32
    %c0_i32_0 = arith.constant 0 : i32
    %4 = arith.cmpi ne, %3, %c0_i32_0 : i32
    scf.if %4 {
      %cst_60 = arith.constant 0.000000e+00 : f32
      %162 = vector.broadcast %cst_60 : f32 to vector<8x128xf32>
      %c0_61 = arith.constant 0 : index
      %c0_62 = arith.constant 0 : index
      %163 = vector.load %arg7[%c0_61, %c0_62] : memref<8x128xf32, #tpu.memory_space<vmem>>, vector<8x128xf32>
      tpu.vector_store %arg7[%c0_61, %c0_62], %162 {strides = array<i32>} : memref<8x128xf32, #tpu.memory_space<vmem>>, vector<8x128xf32>,
      %cst_63 = arith.constant 0.000000e+00 : f32
      %164 = vector.broadcast %cst_63 : f32 to vector<8x128xf32>
      %c0_64 = arith.constant 0 : index
      %c0_65 = arith.constant 0 : index
      %165 = vector.load %arg8[%c0_64, %c0_65] : memref<8x128xf32, #tpu.memory_space<vmem>>, vector<8x128xf32>
      tpu.vector_store %arg8[%c0_64, %c0_65], %164 {strides = array<i32>} : memref<8x128xf32, #tpu.memory_space<vmem>>, vector<8x128xf32>,
    } else {
    }
    %c1024_i32 = arith.constant 1024 : i32
    %5 = arith.muli %1, %c1024_i32 : i32
    %6 = tpu.iota {dimensions = array<i32: 1>} : vector<1x128xi32>
    %cst = arith.constant 0.000000e+00 : f32
    %7 = vector.broadcast %cst : f32 to vector<8x128xf32>
    %cst_1 = arith.constant 0.000000e+00 : f32
    %8 = vector.broadcast %cst_1 : f32 to vector<8x128xf32>
    %c0 = arith.constant 0 : index
    %c0_2 = arith.constant 0 : index
    %9 = vector.load %arg3[%c0, %c0_2] : memref<8x1024xf32, #tpu.memory_space<vmem>>, vector<8x128xf32>
    %c0_3 = arith.constant 0 : index
    %c0_4 = arith.constant 0 : index
    %10 = vector.load %arg4[%c0_3, %c0_4] : memref<8x1024xf32, #tpu.memory_space<vmem>>, vector<8x128xf32>
    %c0_i32_5 = arith.constant 0 : i32
    %11 = arith.addi %5, %c0_i32_5 : i32
    %12 = vector.broadcast %11 : i32 to vector<1x128xi32>
    %13 = arith.addi %12, %6 : vector<1x128xi32>
    %c1000_i32 = arith.constant 1000 : i32
    %14 = vector.broadcast %c1000_i32 : i32 to vector<1x128xi32>
    %15 = arith.cmpi slt, %13, %14 : vector<1x128xi32>
    %cst_6 = arith.constant 0.000000e+00 : f32
    %16 = vector.shape_cast %15 : vector<1x128xi1> to vector<1x128xi1>
    %17 = vector.broadcast %16 : vector<1x128xi1> to vector<8x128xi1>
    %18 = vector.broadcast %cst_6 : f32 to vector<8x128xf32>
    %19 = arith.select %17, %9, %18 : vector<8x128xi1>, vector<8x128xf32>
    %cst_7 = arith.constant 0.000000e+00 : f32
    %20 = vector.shape_cast %15 : vector<1x128xi1> to vector<1x128xi1>
    %21 = vector.broadcast %20 : vector<1x128xi1> to vector<8x128xi1>
    %22 = vector.broadcast %cst_7 : f32 to vector<8x128xf32>
    %23 = arith.select %21, %10, %22 : vector<8x128xi1>, vector<8x128xf32>
    %24 = arith.mulf %19, %23 : vector<8x128xf32>
    %25 = arith.addf %7, %24 : vector<8x128xf32>
    %26 = arith.addf %8, %23 : vector<8x128xf32>
    %c0_8 = arith.constant 0 : index
    %c128 = arith.constant 128 : index
    %27 = vector.load %arg3[%c0_8, %c128] : memref<8x1024xf32, #tpu.memory_space<vmem>>, vector<8x128xf32>
    %c0_9 = arith.constant 0 : index
    %c128_10 = arith.constant 128 : index
    %28 = vector.load %arg4[%c0_9, %c128_10] : memref<8x1024xf32, #tpu.memory_space<vmem>>, vector<8x128xf32>
    %c128_i32 = arith.constant 128 : i32
    %29 = arith.addi %5, %c128_i32 : i32
    %30 = vector.broadcast %29 : i32 to vector<1x128xi32>
    %31 = arith.addi %30, %6 : vector<1x128xi32>
    %c1000_i32_11 = arith.constant 1000 : i32
    %32 = vector.broadcast %c1000_i32_11 : i32 to vector<1x128xi32>
    %33 = arith.cmpi slt, %31, %32 : vector<1x128xi32>
    %cst_12 = arith.constant 0.000000e+00 : f32
    %34 = vector.shape_cast %33 : vector<1x128xi1> to vector<1x128xi1>
    %35 = vector.broadcast %34 : vector<1x128xi1> to vector<8x128xi1>
    %36 = vector.broadcast %cst_12 : f32 to vector<8x128xf32>
    %37 = arith.select %35, %27, %36 : vector<8x128xi1>, vector<8x128xf32>
    %cst_13 = arith.constant 0.000000e+00 : f32
    %38 = vector.shape_cast %33 : vector<1x128xi1> to vector<1x128xi1>
    %39 = vector.broadcast %38 : vector<1x128xi1> to vector<8x128xi1>
    %40 = vector.broadcast %cst_13 : f32 to vector<8x128xf32>
    %41 = arith.select %39, %28, %40 : vector<8x128xi1>, vector<8x128xf32>
    %42 = arith.mulf %37, %41 : vector<8x128xf32>
    %43 = arith.addf %25, %42 : vector<8x128xf32>
    %44 = arith.addf %26, %41 : vector<8x128xf32>
    %c0_14 = arith.constant 0 : index
    %c256 = arith.constant 256 : index
    %45 = vector.load %arg3[%c0_14, %c256] : memref<8x1024xf32, #tpu.memory_space<vmem>>, vector<8x128xf32>
    %c0_15 = arith.constant 0 : index
    %c256_16 = arith.constant 256 : index
    %46 = vector.load %arg4[%c0_15, %c256_16] : memref<8x1024xf32, #tpu.memory_space<vmem>>, vector<8x128xf32>
    %c256_i32 = arith.constant 256 : i32
    %47 = arith.addi %5, %c256_i32 : i32
    %48 = vector.broadcast %47 : i32 to vector<1x128xi32>
    %49 = arith.addi %48, %6 : vector<1x128xi32>
    %c1000_i32_17 = arith.constant 1000 : i32
    %50 = vector.broadcast %c1000_i32_17 : i32 to vector<1x128xi32>
    %51 = arith.cmpi slt, %49, %50 : vector<1x128xi32>
    %cst_18 = arith.constant 0.000000e+00 : f32
    %52 = vector.shape_cast %51 : vector<1x128xi1> to vector<1x128xi1>
    %53 = vector.broadcast %52 : vector<1x128xi1> to vector<8x128xi1>
    %54 = vector.broadcast %cst_18 : f32 to vector<8x128xf32>
    %55 = arith.select %53, %45, %54 : vector<8x128xi1>, vector<8x128xf32>
    %cst_19 = arith.constant 0.000000e+00 : f32
    %56 = vector.shape_cast %51 : vector<1x128xi1> to vector<1x128xi1>
    %57 = vector.broadcast %56 : vector<1x128xi1> to vector<8x128xi1>
    %58 = vector.broadcast %cst_19 : f32 to vector<8x128xf32>
    %59 = arith.select %57, %46, %58 : vector<8x128xi1>, vector<8x128xf32>
    %60 = arith.mulf %55, %59 : vector<8x128xf32>
    %61 = arith.addf %43, %60 : vector<8x128xf32>
    %62 = arith.addf %44, %59 : vector<8x128xf32>
    %c0_20 = arith.constant 0 : index
    %c384 = arith.constant 384 : index
    %63 = vector.load %arg3[%c0_20, %c384] : memref<8x1024xf32, #tpu.memory_space<vmem>>, vector<8x128xf32>
    %c0_21 = arith.constant 0 : index
    %c384_22 = arith.constant 384 : index
    %64 = vector.load %arg4[%c0_21, %c384_22] : memref<8x1024xf32, #tpu.memory_space<vmem>>, vector<8x128xf32>
    %c384_i32 = arith.constant 384 : i32
    %65 = arith.addi %5, %c384_i32 : i32
    %66 = vector.broadcast %65 : i32 to vector<1x128xi32>
    %67 = arith.addi %66, %6 : vector<1x128xi32>
    %c1000_i32_23 = arith.constant 1000 : i32
    %68 = vector.broadcast %c1000_i32_23 : i32 to vector<1x128xi32>
    %69 = arith.cmpi slt, %67, %68 : vector<1x128xi32>
    %cst_24 = arith.constant 0.000000e+00 : f32
    %70 = vector.shape_cast %69 : vector<1x128xi1> to vector<1x128xi1>
    %71 = vector.broadcast %70 : vector<1x128xi1> to vector<8x128xi1>
    %72 = vector.broadcast %cst_24 : f32 to vector<8x128xf32>
    %73 = arith.select %71, %63, %72 : vector<8x128xi1>, vector<8x128xf32>
    %cst_25 = arith.constant 0.000000e+00 : f32
    %74 = vector.shape_cast %69 : vector<1x128xi1> to vector<1x128xi1>
    %75 = vector.broadcast %74 : vector<1x128xi1> to vector<8x128xi1>
    %76 = vector.broadcast %cst_25 : f32 to vector<8x128xf32>
    %77 = arith.select %75, %64, %76 : vector<8x128xi1>, vector<8x128xf32>
    %78 = arith.mulf %73, %77 : vector<8x128xf32>
    %79 = arith.addf %61, %78 : vector<8x128xf32>
    %80 = arith.addf %62, %77 : vector<8x128xf32>
    %c0_26 = arith.constant 0 : index
    %c512 = arith.constant 512 : index
    %81 = vector.load %arg3[%c0_26, %c512] : memref<8x1024xf32, #tpu.memory_space<vmem>>, vector<8x128xf32>
    %c0_27 = arith.constant 0 : index
    %c512_28 = arith.constant 512 : index
    %82 = vector.load %arg4[%c0_27, %c512_28] : memref<8x1024xf32, #tpu.memory_space<vmem>>, vector<8x128xf32>
    %c512_i32 = arith.constant 512 : i32
    %83 = arith.addi %5, %c512_i32 : i32
    %84 = vector.broadcast %83 : i32 to vector<1x128xi32>
    %85 = arith.addi %84, %6 : vector<1x128xi32>
    %c1000_i32_29 = arith.constant 1000 : i32
    %86 = vector.broadcast %c1000_i32_29 : i32 to vector<1x128xi32>
    %87 = arith.cmpi slt, %85, %86 : vector<1x128xi32>
    %cst_30 = arith.constant 0.000000e+00 : f32
    %88 = vector.shape_cast %87 : vector<1x128xi1> to vector<1x128xi1>
    %89 = vector.broadcast %88 : vector<1x128xi1> to vector<8x128xi1>
    %90 = vector.broadcast %cst_30 : f32 to vector<8x128xf32>
    %91 = arith.select %89, %81, %90 : vector<8x128xi1>, vector<8x128xf32>
    %cst_31 = arith.constant 0.000000e+00 : f32
    %92 = vector.shape_cast %87 : vector<1x128xi1> to vector<1x128xi1>
    %93 = vector.broadcast %92 : vector<1x128xi1> to vector<8x128xi1>
    %94 = vector.broadcast %cst_31 : f32 to vector<8x128xf32>
    %95 = arith.select %93, %82, %94 : vector<8x128xi1>, vector<8x128xf32>
    %96 = arith.mulf %91, %95 : vector<8x128xf32>
    %97 = arith.addf %79, %96 : vector<8x128xf32>
    %98 = arith.addf %80, %95 : vector<8x128xf32>
    %c0_32 = arith.constant 0 : index
    %c640 = arith.constant 640 : index
    %99 = vector.load %arg3[%c0_32, %c640] : memref<8x1024xf32, #tpu.memory_space<vmem>>, vector<8x128xf32>
    %c0_33 = arith.constant 0 : index
    %c640_34 = arith.constant 640 : index
    %100 = vector.load %arg4[%c0_33, %c640_34] : memref<8x1024xf32, #tpu.memory_space<vmem>>, vector<8x128xf32>
    %c640_i32 = arith.constant 640 : i32
    %101 = arith.addi %5, %c640_i32 : i32
    %102 = vector.broadcast %101 : i32 to vector<1x128xi32>
    %103 = arith.addi %102, %6 : vector<1x128xi32>
    %c1000_i32_35 = arith.constant 1000 : i32
    %104 = vector.broadcast %c1000_i32_35 : i32 to vector<1x128xi32>
    %105 = arith.cmpi slt, %103, %104 : vector<1x128xi32>
    %cst_36 = arith.constant 0.000000e+00 : f32
    %106 = vector.shape_cast %105 : vector<1x128xi1> to vector<1x128xi1>
    %107 = vector.broadcast %106 : vector<1x128xi1> to vector<8x128xi1>
    %108 = vector.broadcast %cst_36 : f32 to vector<8x128xf32>
    %109 = arith.select %107, %99, %108 : vector<8x128xi1>, vector<8x128xf32>
    %cst_37 = arith.constant 0.000000e+00 : f32
    %110 = vector.shape_cast %105 : vector<1x128xi1> to vector<1x128xi1>
    %111 = vector.broadcast %110 : vector<1x128xi1> to vector<8x128xi1>
    %112 = vector.broadcast %cst_37 : f32 to vector<8x128xf32>
    %113 = arith.select %111, %100, %112 : vector<8x128xi1>, vector<8x128xf32>
    %114 = arith.mulf %109, %113 : vector<8x128xf32>
    %115 = arith.addf %97, %114 : vector<8x128xf32>
    %116 = arith.addf %98, %113 : vector<8x128xf32>
    %c0_38 = arith.constant 0 : index
    %c768 = arith.constant 768 : index
    %117 = vector.load %arg3[%c0_38, %c768] : memref<8x1024xf32, #tpu.memory_space<vmem>>, vector<8x128xf32>
    %c0_39 = arith.constant 0 : index
    %c768_40 = arith.constant 768 : index
    %118 = vector.load %arg4[%c0_39, %c768_40] : memref<8x1024xf32, #tpu.memory_space<vmem>>, vector<8x128xf32>
    %c768_i32 = arith.constant 768 : i32
    %119 = arith.addi %5, %c768_i32 : i32
    %120 = vector.broadcast %119 : i32 to vector<1x128xi32>
    %121 = arith.addi %120, %6 : vector<1x128xi32>
    %c1000_i32_41 = arith.constant 1000 : i32
    %122 = vector.broadcast %c1000_i32_41 : i32 to vector<1x128xi32>
    %123 = arith.cmpi slt, %121, %122 : vector<1x128xi32>
    %cst_42 = arith.constant 0.000000e+00 : f32
    %124 = vector.shape_cast %123 : vector<1x128xi1> to vector<1x128xi1>
    %125 = vector.broadcast %124 : vector<1x128xi1> to vector<8x128xi1>
    %126 = vector.broadcast %cst_42 : f32 to vector<8x128xf32>
    %127 = arith.select %125, %117, %126 : vector<8x128xi1>, vector<8x128xf32>
    %cst_43 = arith.constant 0.000000e+00 : f32
    %128 = vector.shape_cast %123 : vector<1x128xi1> to vector<1x128xi1>
    %129 = vector.broadcast %128 : vector<1x128xi1> to vector<8x128xi1>
    %130 = vector.broadcast %cst_43 : f32 to vector<8x128xf32>
    %131 = arith.select %129, %118, %130 : vector<8x128xi1>, vector<8x128xf32>
    %132 = arith.mulf %127, %131 : vector<8x128xf32>
    %133 = arith.addf %115, %132 : vector<8x128xf32>
    %134 = arith.addf %116, %131 : vector<8x128xf32>
    %c0_44 = arith.constant 0 : index
    %c896 = arith.constant 896 : index
    %135 = vector.load %arg3[%c0_44, %c896] : memref<8x1024xf32, #tpu.memory_space<vmem>>, vector<8x128xf32>
    %c0_45 = arith.constant 0 : index
    %c896_46 = arith.constant 896 : index
    %136 = vector.load %arg4[%c0_45, %c896_46] : memref<8x1024xf32, #tpu.memory_space<vmem>>, vector<8x128xf32>
    %c896_i32 = arith.constant 896 : i32
    %137 = arith.addi %5, %c896_i32 : i32
    %138 = vector.broadcast %137 : i32 to vector<1x128xi32>
    %139 = arith.addi %138, %6 : vector<1x128xi32>
    %c1000_i32_47 = arith.constant 1000 : i32
    %140 = vector.broadcast %c1000_i32_47 : i32 to vector<1x128xi32>
    %141 = arith.cmpi slt, %139, %140 : vector<1x128xi32>
    %cst_48 = arith.constant 0.000000e+00 : f32
    %142 = vector.shape_cast %141 : vector<1x128xi1> to vector<1x128xi1>
    %143 = vector.broadcast %142 : vector<1x128xi1> to vector<8x128xi1>
    %144 = vector.broadcast %cst_48 : f32 to vector<8x128xf32>
    %145 = arith.select %143, %135, %144 : vector<8x128xi1>, vector<8x128xf32>
    %cst_49 = arith.constant 0.000000e+00 : f32
    %146 = vector.shape_cast %141 : vector<1x128xi1> to vector<1x128xi1>
    %147 = vector.broadcast %146 : vector<1x128xi1> to vector<8x128xi1>
    %148 = vector.broadcast %cst_49 : f32 to vector<8x128xf32>
    %149 = arith.select %147, %136, %148 : vector<8x128xi1>, vector<8x128xf32>
    %150 = arith.mulf %145, %149 : vector<8x128xf32>
    %151 = arith.addf %133, %150 : vector<8x128xf32>
    %152 = arith.addf %134, %149 : vector<8x128xf32>
    %c0_50 = arith.constant 0 : index
    %c0_51 = arith.constant 0 : index
    %153 = vector.load %arg7[%c0_50, %c0_51] : memref<8x128xf32, #tpu.memory_space<vmem>>, vector<8x128xf32>
    %154 = arith.addf %153, %151 : vector<8x128xf32>
    %c0_52 = arith.constant 0 : index
    %c0_53 = arith.constant 0 : index
    %155 = vector.load %arg7[%c0_52, %c0_53] : memref<8x128xf32, #tpu.memory_space<vmem>>, vector<8x128xf32>
    tpu.vector_store %arg7[%c0_52, %c0_53], %154 {strides = array<i32>} : memref<8x128xf32, #tpu.memory_space<vmem>>, vector<8x128xf32>,
    %c0_54 = arith.constant 0 : index
    %c0_55 = arith.constant 0 : index
    %156 = vector.load %arg8[%c0_54, %c0_55] : memref<8x128xf32, #tpu.memory_space<vmem>>, vector<8x128xf32>
    %157 = arith.addf %156, %152 : vector<8x128xf32>
    %c0_56 = arith.constant 0 : index
    %c0_57 = arith.constant 0 : index
    %158 = vector.load %arg8[%c0_56, %c0_57] : memref<8x128xf32, #tpu.memory_space<vmem>>, vector<8x128xf32>
    tpu.vector_store %arg8[%c0_56, %c0_57], %157 {strides = array<i32>} : memref<8x128xf32, #tpu.memory_space<vmem>>, vector<8x128xf32>,
    %c0_i32_58 = arith.constant 0 : i32
    %159 = arith.cmpi eq, %arg1, %c0_i32_58 : i32
    %160 = arith.extui %159 : i1 to i32
    %c0_i32_59 = arith.constant 0 : i32
    %161 = arith.cmpi ne, %160, %c0_i32_59 : i32
    scf.if %161 {
      %c0_60 = arith.constant 0 : index
      %c0_61 = arith.constant 0 : index
      %162 = vector.load %arg2[%c0_60, %c0_61] : memref<8x1xf32, #tpu.memory_space<vmem>>, vector<8x1xf32>
      %c0_62 = arith.constant 0 : index
      %c0_63 = arith.constant 0 : index
      %163 = vector.load %arg7[%c0_62, %c0_63] : memref<8x128xf32, #tpu.memory_space<vmem>>, vector<8x128xf32>
      %cst_64 = arith.constant dense<0.000000e+00> : vector<8xf32>
      %164 = vector.multi_reduction <add>, %163, %cst_64 [1] : vector<8x128xf32> to vector<8xf32>
      %165 = vector.shape_cast %164 : vector<8xf32> to vector<8x1xf32>
      %166 = arith.mulf %165, %162 : vector<8x1xf32>
      %167 = vector.shape_cast %166 : vector<8x1xf32> to vector<1x8x1xf32>
      %cst_65 = arith.constant dense<0.000000e+00> : vector<1xf32>
      %168 = vector.multi_reduction <add>, %167, %cst_65 [1, 2] : vector<1x8x1xf32> to vector<1xf32>
      %169 = vector.shape_cast %168 : vector<1xf32> to vector<1x1x1xf32>
      %170 = vector.extract %169[0, 0, 0] : f32 from vector<1x1x1xf32>
      %171 = vector.broadcast %170 : f32 to vector<1x1xf32>
      %172 = vector.shape_cast %171 : vector<1x1xf32> to vector<1x1x1xf32>
      %c0_66 = arith.constant 0 : index
      %c0_67 = arith.constant 0 : index
      %c0_68 = arith.constant 0 : index
      %173 = vector.load %arg5[%c0_66, %c0_67, %c0_68] : memref<1x1x1xf32, #tpu.memory_space<vmem>>, vector<1x1x1xf32>
      tpu.vector_store %arg5[%c0_66, %c0_67, %c0_68], %172 {strides = array<i32>} : memref<1x1x1xf32, #tpu.memory_space<vmem>>, vector<1x1x1xf32>,
      %c0_69 = arith.constant 0 : index
      %c0_70 = arith.constant 0 : index
      %174 = vector.load %arg8[%c0_69, %c0_70] : memref<8x128xf32, #tpu.memory_space<vmem>>, vector<8x128xf32>
      %175 = vector.shape_cast %174 : vector<8x128xf32> to vector<1x8x128xf32>
      %cst_71 = arith.constant dense<0.000000e+00> : vector<1xf32>
      %176 = vector.multi_reduction <add>, %175, %cst_71 [1, 2] : vector<1x8x128xf32> to vector<1xf32>
      %177 = vector.shape_cast %176 : vector<1xf32> to vector<1x1x1xf32>
      %178 = vector.extract %177[0, 0, 0] : f32 from vector<1x1x1xf32>
      %179 = vector.broadcast %178 : f32 to vector<1x1xf32>
      %180 = vector.shape_cast %179 : vector<1x1xf32> to vector<1x1x1xf32>
      %c0_72 = arith.constant 0 : index
      %c0_73 = arith.constant 0 : index
      %c0_74 = arith.constant 0 : index
      %181 = vector.load %arg6[%c0_72, %c0_73, %c0_74] : memref<1x1x1xf32, #tpu.memory_space<vmem>>, vector<1x1x1xf32>
      tpu.vector_store %arg6[%c0_72, %c0_73, %c0_74], %180 {strides = array<i32>} : memref<1x1x1xf32, #tpu.memory_space<vmem>>, vector<1x1x1xf32>,
    } else {
    }
    return
  }
  func.func @transform_0(%arg0: i32, %arg1: i32) -> (i32, i32) {
    %c0_i32 = arith.constant 0 : i32
    %c0_i32_0 = arith.constant 0 : i32
    %c0_i32_1 = arith.constant 0 : i32
    return %c0_i32, %c0_i32_0 : i32, i32
  }
  func.func @transform_1(%arg0: i32, %arg1: i32) -> (i32, i32) {
    %c1_i32 = arith.constant 1 : i32
    %0 = arith.muli %arg0, %c1_i32 : i32
    %1 = arith.addi %0, %arg1 : i32
    %c0_i32 = arith.constant 0 : i32
    %c0_i32_0 = arith.constant 0 : i32
    return %c0_i32, %1 : i32, i32
  }
  func.func @transform_2(%arg0: i32, %arg1: i32) -> (i32, i32) {
    %c1_i32 = arith.constant 1 : i32
    %0 = arith.muli %arg0, %c1_i32 : i32
    %1 = arith.addi %0, %arg1 : i32
    %c0_i32 = arith.constant 0 : i32
    %c0_i32_0 = arith.constant 0 : i32
    return %c0_i32, %1 : i32, i32
  }
  func.func @transform_3(%arg0: i32, %arg1: i32) -> (i32, i32, i32) {
    %c0_i32 = arith.constant 0 : i32
    %c0_i32_0 = arith.constant 0 : i32
    %c0_i32_1 = arith.constant 0 : i32
    return %arg0, %c0_i32, %c0_i32_0 : i32, i32, i32
  }
  func.func @transform_4(%arg0: i32, %arg1: i32) -> (i32, i32, i32) {
    %c0_i32 = arith.constant 0 : i32
    %c0_i32_0 = arith.constant 0 : i32
    %c0_i32_1 = arith.constant 0 : i32
    return %arg0, %c0_i32, %c0_i32_0 : i32, i32, i32
  }
}

</mosaic_0001>

<llo_original>
// kernel: tpu_custom_call.1
$region0: #{tpu_custom_call.1}
  #allocation0 [shape = 'u32[]', space=smem, size = 0x4, offset = 0x4, fixed_abs, tag = 'smem constant byte address 0x4 - core index']
  #allocation1 [shape = 'u32[144,128]{1,0:T(1,128)}', space=vmem, size = 0x12000, scoped, tag = 'internal scratch']
  #allocation2 [shape = 'f32[8,128]{1,0:T(8,128)}', space=vmem, size = 0x1000, scoped, tag = 'scratch operand']
  #allocation3 [shape = 'f32[8,128]{1,0:T(8,128)}', space=vmem, size = 0x1000, scoped, tag = 'scratch operand']
  %s0 = inlined_call_operand.vmem [shape: f32[8,1], index: 0, kind: input, shape index: {}]
  %s1 = inlined_call_operand.hbm [shape: f32[8,1000], index: 1, kind: input, shape index: {}]
  %s2 = inlined_call_operand.hbm [shape: f32[8,1000], index: 2, kind: input, shape index: {}]
  %s3 = inlined_call_operand.hbm [shape: f32[1,1,1], index: 3, kind: output, shape index: {0}]
  %s4 = inlined_call_operand.hbm [shape: f32[1,1,1], index: 4, kind: output, shape index: {1}]
  %5 = xla_tuple %s3, %s4
  %s6 = sld [smem:[#allocation0]]
  $region46: #{tpu_custom_call.1} parent=0
    _
  %s8 = ssub.s32 1, %s6
  %s9 = scalar_select 0, %s8, %s6
  $region1: #{tpu_custom_call.1} parent=0
    #allocation4 [shape = 'u8[32768]{0}', space=vmem, size = 0x8000, scoped, tag = 'input window, operand 1, single buffered']
    #allocation5 [shape = 's32[1]{0}', space=sflag, size = 0x4, scoped, tag = 'scoped memory for tpu_custom_call.1']
    #allocation6 [shape = 's32[1]{0}', space=sflag, size = 0x4, scoped, tag = 'scoped memory for tpu_custom_call.1']
    #allocation7 [shape = 'u8[32768]{0}', space=vmem, size = 0x8000, scoped, tag = 'input window, operand 2, single buffered']
    #allocation8 [shape = 's32[1]{0}', space=sflag, size = 0x4, scoped, tag = 'scoped memory for tpu_custom_call.1']
    #allocation9 [shape = 'u8[512]{0}', space=vmem, size = 0x400, scoped, tag = 'output window, operand 0, single buffered']
    #allocation10 [shape = 'u8[512]{0}', space=vmem, size = 0x400, scoped, tag = 'output window, operand 1, single buffered']
    #allocation11 [shape = 's32[1]{0}', space=sflag, size = 0x4, scoped, tag = 'scoped memory for tpu_custom_call.1']
    %10 = vsyncpa [#allocation5], 0
    %11 = vsyncpa [#allocation8], 0
    %12 = vsyncpa [#allocation6], 0
    %13 = vsyncpa [#allocation11], 0
    // Predicated region
    $region2: #{tpu_custom_call.1} parent=1 // pred_check
      _
    $region3: #{tpu_custom_call.1} parent=1 // pred_check_branch
      %15 = sbr.rel (0) target = $region5
    $region4: #{tpu_custom_call.1} parent=1 // pred_region
      _
    $region5: #{tpu_custom_call.1} parent=1 // pred_fallthru
      _
    // Predicated region
    $region6: #{tpu_custom_call.1} parent=1 // pred_check
      _
    $region7: #{tpu_custom_call.1} parent=1 // pred_check_branch
      %17 = sbr.rel (0) target = $region9
    $region8: #{tpu_custom_call.1} parent=1 // pred_region
      %s18 = sadd.s32 0, 0
      %s19 = smul.u32 8, %s18
      %s21 = ssub.s32 1024, 1024
      %22 = vsyncadd [#allocation5], %s21
      %s23 = smul.addr %s19, 128
      %s24 = scalar_lea.hbm %s1, %s23
      %s26 = sshll.u32 [#allocation4], 4
      %s27 = int_to_ptr.vmem [resolvable:$true] %s26
      %29 = dma.hbm_to_vmem [thread:$0]  %s24, 1024, %s27, [#allocation5]
    $region9: #{tpu_custom_call.1} parent=1 // pred_fallthru
      _
    // Predicated region
    $region10: #{tpu_custom_call.1} parent=1 // pred_check
      _
    $region11: #{tpu_custom_call.1} parent=1 // pred_check_branch
      %31 = sbr.rel (0) target = $region13
    $region12: #{tpu_custom_call.1} parent=1 // pred_region
      %s32 = sadd.s32 0, 0
      %s33 = smul.u32 8, %s32
      %s35 = ssub.s32 1024, 1024
      %36 = vsyncadd [#allocation8], %s35
      %s37 = smul.addr %s33, 128
      %s38 = scalar_lea.hbm %s2, %s37
      %s40 = sshll.u32 [#allocation7], 4
      %s41 = int_to_ptr.vmem [resolvable:$true] %s40
      %43 = dma.hbm_to_vmem [thread:$0]  %s38, 1024, %s41, [#allocation8]
    $region13: #{tpu_custom_call.1} parent=1 // pred_fallthru
      _
    // Predicated region
    $region14: #{tpu_custom_call.1} parent=1 // pred_check
      _
    $region15: #{tpu_custom_call.1} parent=1 // pred_check_branch
      %45 = sbr.rel (0) target = $region17
    $region16: #{tpu_custom_call.1} parent=1 // pred_region
      %46 = dma.done [#allocation5], 1024
    $region17: #{tpu_custom_call.1} parent=1 // pred_fallthru
      _
    // Predicated region
    $region18: #{tpu_custom_call.1} parent=1 // pred_check
      _
    $region19: #{tpu_custom_call.1} parent=1 // pred_check_branch
      %48 = sbr.rel (0) target = $region21
    $region20: #{tpu_custom_call.1} parent=1 // pred_region
      %49 = dma.done [#allocation8], 1024
    $region21: #{tpu_custom_call.1} parent=1 // pred_fallthru
      _
    %s50 = sadd.s32 0, 0
    %s51 = smul.u32 8, %s50
    %s52 = sadd.s32 0, 0
    %s53 = smul.u32 8, %s52
    %s54 = sadd.s32 0, 0
    %p55 = scmp.eq.s32.totalorder 0, 0
    // Predicated region
    $region22: #{tpu_custom_call.1} parent=1 // pred_check
      %p56 = pneg %p55
    $region23: #{tpu_custom_call.1} parent=1 // pred_check_branch
      %58 = sbr.rel (%p56) target = $region25
    $region24: #{tpu_custom_call.1} parent=1 // pred_region
      %59 = vst [vmem:[#allocation2] sm:$0xff] 0.0
      %60 = vst [vmem:[#allocation3] sm:$0xff] 0.0
    $region25: #{tpu_custom_call.1} parent=1 // pred_fallthru
      _
    %s61 = smul.u32 %s54, 1024
    %v62 = vlaneseq
    %v63 = vand.u32 %v62, 127
    %v64 = vld [vmem:[#allocation4] sm:$0xff]
    %v65 = vld [vmem:[#allocation7] sm:$0xff]
    %v66 = vstv %s61
    %v67 = vadd.s32 %v66, %v63
    %vm68 = vcmp.lt.s32.totalorder %v67, 1000
    %v69 = vsel %vm68, 1, 0
    %vm70 = vcmp.eq.s32.totalorder %v69, 1
    %v71 = vsel %vm70, %v64, 0.0
    %v72 = vsel %vm70, %v65, 0.0
    %v73 = vmul.f32 %v71, %v72
    %v74 = vadd.f32 %v73, 0.0
    %v75 = vadd.f32 %v72, 0.0
    %v76 = vld [vmem:[#allocation4 + $0x8] sm:$0xff]
    %v77 = vld [vmem:[#allocation7 + $0x8] sm:$0xff]
    %s78 = sadd.s32 %s61, 128
    %v79 = vstv %s78
    %v80 = vadd.s32 %v79, %v63
    %vm81 = vcmp.lt.s32.totalorder %v80, 1000
    %v82 = vsel %vm81, 1, 0
    %vm83 = vcmp.eq.s32.totalorder %v82, 1
    %v84 = vsel %vm83, %v76, 0.0
    %v85 = vsel %vm83, %v77, 0.0
    %v86 = vmul.f32 %v84, %v85
    %v87 = vadd.f32 %v74, %v86
    %v88 = vadd.f32 %v75, %v85
    %v89 = vld [vmem:[#allocation4 + $0x10] sm:$0xff]
    %v90 = vld [vmem:[#allocation7 + $0x10] sm:$0xff]
    %s91 = sadd.s32 %s61, 256
    %v92 = vstv %s91
    %v93 = vadd.s32 %v92, %v63
    %vm94 = vcmp.lt.s32.totalorder %v93, 1000
    %v95 = vsel %vm94, 1, 0
    %vm96 = vcmp.eq.s32.totalorder %v95, 1
    %v97 = vsel %vm96, %v89, 0.0
    %v98 = vsel %vm96, %v90, 0.0
    %v99 = vmul.f32 %v97, %v98
    %v100 = vadd.f32 %v87, %v99
    %v101 = vadd.f32 %v88, %v98
    %v102 = vld [vmem:[#allocation4 + $0x18] sm:$0xff]
    %v103 = vld [vmem:[#allocation7 + $0x18] sm:$0xff]
    %s104 = sadd.s32 %s61, 384
    %v105 = vstv %s104
    %v106 = vadd.s32 %v105, %v63
    %vm107 = vcmp.lt.s32.totalorder %v106, 1000
    %v108 = vsel %vm107, 1, 0
    %vm109 = vcmp.eq.s32.totalorder %v108, 1
    %v110 = vsel %vm109, %v102, 0.0
    %v111 = vsel %vm109, %v103, 0.0
    %v112 = vmul.f32 %v110, %v111
    %v113 = vadd.f32 %v100, %v112
    %v114 = vadd.f32 %v101, %v111
    %v115 = vld [vmem:[#allocation4 + $0x20] sm:$0xff]
    %v116 = vld [vmem:[#allocation7 + $0x20] sm:$0xff]
    %s117 = sadd.s32 %s61, 512
    %v118 = vstv %s117
    %v119 = vadd.s32 %v118, %v63
    %vm120 = vcmp.lt.s32.totalorder %v119, 1000
    %v121 = vsel %vm120, 1, 0
    %vm122 = vcmp.eq.s32.totalorder %v121, 1
    %v123 = vsel %vm122, %v115, 0.0
    %v124 = vsel %vm122, %v116, 0.0
    %v125 = vmul.f32 %v123, %v124
    %v126 = vadd.f32 %v113, %v125
    %v127 = vadd.f32 %v114, %v124
    %v128 = vld [vmem:[#allocation4 + $0x28] sm:$0xff]
    %v129 = vld [vmem:[#allocation7 + $0x28] sm:$0xff]
    %s130 = sadd.s32 %s61, 640
    %v131 = vstv %s130
    %v132 = vadd.s32 %v131, %v63
    %vm133 = vcmp.lt.s32.totalorder %v132, 1000
    %v134 = vsel %vm133, 1, 0
    %vm135 = vcmp.eq.s32.totalorder %v134, 1
    %v136 = vsel %vm135, %v128, 0.0
    %v137 = vsel %vm135, %v129, 0.0
    %v138 = vmul.f32 %v136, %v137
    %v139 = vadd.f32 %v126, %v138
    %v140 = vadd.f32 %v127, %v137
    %v141 = vld [vmem:[#allocation4 + $0x30] sm:$0xff]
    %v142 = vld [vmem:[#allocation7 + $0x30] sm:$0xff]
    %s143 = sadd.s32 %s61, 768
    %v144 = vstv %s143
    %v145 = vadd.s32 %v144, %v63
    %vm146 = vcmp.lt.s32.totalorder %v145, 1000
    %v147 = vsel %vm146, 1, 0
    %vm148 = vcmp.eq.s32.totalorder %v147, 1
    %v149 = vsel %vm148, %v141, 0.0
    %v150 = vsel %vm148, %v142, 0.0
    %v151 = vmul.f32 %v149, %v150
    %v152 = vadd.f32 %v139, %v151
    %v153 = vadd.f32 %v140, %v150
    %v154 = vld [vmem:[#allocation4 + $0x38] sm:$0xff]
    %v155 = vld [vmem:[#allocation7 + $0x38] sm:$0xff]
    %s156 = sadd.s32 %s61, 896
    %v157 = vstv %s156
    %v158 = vadd.s32 %v157, %v63
    %vm159 = vcmp.lt.s32.totalorder %v158, 1000
    %v160 = vsel %vm159, 1, 0
    %vm161 = vcmp.eq.s32.totalorder %v160, 1
    %v162 = vsel %vm161, %v154, 0.0
    %v163 = vsel %vm161, %v155, 0.0
    %v164 = vmul.f32 %v162, %v163
    %v165 = vadd.f32 %v152, %v164
    %v166 = vadd.f32 %v153, %v163
    %v167 = vld [vmem:[#allocation2] sm:$0xff]
    %v168 = vadd.f32 %v167, %v165
    %169 = vst [vmem:[#allocation2] sm:$0xff] %v168
    %v170 = vld [vmem:[#allocation3] sm:$0xff]
    %v171 = vadd.f32 %v170, %v166
    %172 = vst [vmem:[#allocation3] sm:$0xff] %v171
    // Predicated region
    $region26: #{tpu_custom_call.1} parent=1 // pred_check
      %p173 = pneg %p55
    $region27: #{tpu_custom_call.1} parent=1 // pred_check_branch
      %175 = sbr.rel (%p173) target = $region29
    $region28: #{tpu_custom_call.1} parent=1 // pred_region
      %v176 = vld [vmem:[%s0] sm:$0xff]
      %v177 = vld [vmem:[#allocation2] sm:$0xff]
      %178 = vadd.xlane.f32.xlu0 %v177
      %v179 = vpop.xlane.xlu0 %178
      %v180 = vmul.f32 %v179, %v176
      %vm181 = vcmask 7168
      %v182 = vsel %vm181, %v180, 0.0
      %183 = vadd.xlane.f32.xlu0 %v182
      %v184 = vpop.xlane.xlu0 %183
      %v185 = vrot.slane %v184, 4
      %v186 = vadd.f32 %v184, %v185
      %v187 = vrot.slane %v186, 2
      %v188 = vadd.f32 %v186, %v187
      %v189 = vrot.slane %v188, 1
      %v190 = vadd.f32 %v188, %v189
      %s191 = vtos %v190
      %v192 = vstv %s191
      %vm193 = vcmask 0
      %194 = vst.msk [vmem:[#allocation9] sm:$0x1] %vm193, %v192
      %v195 = vld [vmem:[#allocation3] sm:$0xff]
      %196 = vadd.xlane.f32.xlu0 %v195
      %v197 = vpop.xlane.xlu0 %196
      %v198 = vrot.slane %v197, 4
      %v199 = vadd.f32 %v197, %v198
      %v200 = vrot.slane %v199, 2
      %v201 = vadd.f32 %v199, %v200
      %v202 = vrot.slane %v201, 1
      %v203 = vadd.f32 %v201, %v202
      %s204 = vtos %v203
      %v205 = vstv %s204
      %206 = vst.msk [vmem:[#allocation10] sm:$0x1] %vm193, %v205
    $region29: #{tpu_custom_call.1} parent=1 // pred_fallthru
      _
    // Predicated region
    $region30: #{tpu_custom_call.1} parent=1 // pred_check
      _
    $region31: #{tpu_custom_call.1} parent=1 // pred_check_branch
      %208 = sbr.rel (0) target = $region33
    $region32: #{tpu_custom_call.1} parent=1 // pred_region
      %s210 = ssub.s32 16, 16
      %211 = vsyncadd [#allocation6], %s210
      %s213 = sshll.u32 [#allocation9], 4
      %s214 = int_to_ptr.vmem [resolvable:$true] %s213
      %216 = dma.vmem_to_hbm [thread:$0]  %s214, 16, %s3, [#allocation6]
    $region33: #{tpu_custom_call.1} parent=1 // pred_fallthru
      _
    // Predicated region
    $region34: #{tpu_custom_call.1} parent=1 // pred_check
      _
    $region35: #{tpu_custom_call.1} parent=1 // pred_check_branch
      %218 = sbr.rel (0) target = $region37
    $region36: #{tpu_custom_call.1} parent=1 // pred_region
      %s220 = ssub.s32 16, 16
      %221 = vsyncadd [#allocation11], %s220
      %s223 = sshll.u32 [#allocation10], 4
      %s224 = int_to_ptr.vmem [resolvable:$true] %s223
      %226 = dma.vmem_to_hbm [thread:$0]  %s224, 16, %s4, [#allocation11]
    $region37: #{tpu_custom_call.1} parent=1 // pred_fallthru
      _
    // Predicated region
    $region38: #{tpu_custom_call.1} parent=1 // pred_check
      _
    $region39: #{tpu_custom_call.1} parent=1 // pred_check_branch
      %228 = sbr.rel (0) target = $region41
    $region40: #{tpu_custom_call.1} parent=1 // pred_region
      %229 = dma.done [#allocation6], 16
    $region41: #{tpu_custom_call.1} parent=1 // pred_fallthru
      _
    // Predicated region
    $region42: #{tpu_custom_call.1} parent=1 // pred_check
      _
    $region43: #{tpu_custom_call.1} parent=1 // pred_check_branch
      %231 = sbr.rel (0) target = $region45
    $region44: #{tpu_custom_call.1} parent=1 // pred_region
      %232 = dma.done [#allocation11], 16
    $region45: #{tpu_custom_call.1} parent=1 // pred_fallthru
      _
    %233 = vsyncpa [#allocation5], 1
    %234 = vsyncpa [#allocation8], 1
    %235 = vsyncpa [#allocation6], 1
    %236 = vsyncpa [#allocation11], 1

</llo_original>
